<compile_context>
chip_gen: v7x
topology: tpu7x:2x2x1
jax: 0.10.0
libtpu: 0.0.40
codegen_flags: <defaults>
</compile_context>

<pallas_src>
import functools

import jax
import jax.numpy as jnp
from jax import lax
from jax.experimental import pallas as pl
from jax.experimental.pallas import tpu as pltpu


def _lane_partial(v):
    """(C, S, W) -> (1, W): reduce channel (vreg adds) + sublane axes, keep lanes."""
    s = jnp.sum(v, axis=0)                       # (S, W)   cheap adds over leading dim
    return jnp.sum(s, axis=0, keepdims=True)     # (1, W)   sublane reduce, lanes kept


def _tv3d_kernel(lut_ref, out_ref, *, dim):
    d = dim
    dd = d * d
    x = lut_ref[...]                              # (3, d, d*d) f32, lane-dense

    # All three axes have the same element count: 3 * d * d * (d-1).
    inv_n = 1.0 / (3.0 * d * d * (d - 1))

    # ---- R axis (minor axis of the original LUT) -------------------------
    # dif[col] = x[col] - x[col+1]; valid only where col % d != d-1;
    # edge weight 2 where col % d in {0, d-2}.
    dif_r = x[:, :, : dd - 1] - x[:, :, 1:]       # (3, d, dd-1)
    sq_r = _lane_partial(dif_r * dif_r)           # (1, dd-1) per-lane partial sums
    pos_r = _lane_partial(jnp.maximum(dif_r, 0.0))

    # Per-column weight/validity row built in-kernel (no HBM operand, no int mod):
    # r = col % d via an exact float floor-divide (values are small exact ints).
    col_r = lax.broadcasted_iota(jnp.int32, (1, dd - 1), 1).astype(jnp.float32)
    g_r = jnp.floor((col_r + 0.5) * (1.0 / d))
    r_r = col_r - g_r * d                         # exact col % d
    valid_r = (r_r < d - 1.5).astype(jnp.float32)            # 0 where r == d-1
    edge_lo = (r_r < 0.5).astype(jnp.float32)                 # r == 0
    edge_hi = ((r_r > d - 2.5) & (r_r < d - 1.5)).astype(jnp.float32)  # r == d-2
    w_r = valid_r + edge_lo + edge_hi                          # 0 / 1 / 2

    tv_sum = jnp.sum(sq_r * w_r)
    mn_sum = jnp.sum(pos_r * valid_r)

    # ---- G axis -----------------------------------------------------------
    # dif[col] = x[col] - x[col+d], col in [0, d*(d-1)); always valid.
    wg_width = dd - d
    dif_g = x[:, :, :wg_width] - x[:, :, d:]      # (3, d, d*(d-1))
    sq_g = _lane_partial(dif_g * dif_g)           # (1, d*(d-1))
    pos_g = _lane_partial(jnp.maximum(dif_g, 0.0))
    col_g = lax.broadcasted_iota(jnp.int32, (1, wg_width), 1)
    w_g = (1.0 + (col_g < d).astype(jnp.float32)
           + (col_g >= d * (d - 2)).astype(jnp.float32))       # 1 / 2
    tv_sum += jnp.sum(sq_g * w_g)
    mn_sum += jnp.sum(pos_g)

    # ---- B axis (sublane axis) ---------------------------------------------
    # dif[b] = x[b] - x[b+1]; weight 2 on rows b in {0, d-2} handled by
    # double-counting those two rows (weight 2 == count twice).
    dif_b = x[:, : d - 1, :] - x[:, 1:, :]        # (3, d-1, dd)
    sq_b = _lane_partial(dif_b * dif_b)           # (1, dd)
    pos_b = _lane_partial(jnp.maximum(dif_b, 0.0))
    e0 = x[:, 0:1, :] - x[:, 1:2, :]              # (3, 1, dd) edge row b == 0
    e1 = x[:, d - 2:d - 1, :] - x[:, d - 1:d, :]  # (3, 1, dd) edge row b == d-2
    sq_b = sq_b + _lane_partial(e0 * e0) + _lane_partial(e1 * e1)
    tv_sum += jnp.sum(sq_b)
    mn_sum += jnp.sum(pos_b)

    out_ref[0] = tv_sum * inv_n
    out_ref[1] = mn_sum * inv_n


def tv_3d(lut):
    """Pallas wrapper. lut: (3, dim, dim, dim) f32 -> (tv, mn) scalars."""
    assert lut.ndim == 4 and lut.shape[0] == 3
    d = lut.shape[1]
    assert lut.shape == (3, d, d, d)

    lut_flat = lut.reshape(3, d, d * d)           # lane-dense view, free reshape

    out = pl.pallas_call(
        functools.partial(_tv3d_kernel, dim=d),
        out_shape=jax.ShapeDtypeStruct((2,), jnp.float32),
        in_specs=[pl.BlockSpec(memory_space=pltpu.MemorySpace.VMEM)],
        out_specs=pl.BlockSpec(memory_space=pltpu.MemorySpace.SMEM),
        cost_estimate=pl.CostEstimate(
            flops=int(10 * 3 * d ** 3),
            transcendentals=0,
            bytes_accessed=int(4 * 3 * d ** 3) + 8,
        ),
    )(lut_flat)
    return out[0], out[1]


# ----------------------------------------------------------------------------
# Pure-JAX reference (mirrors the PyTorch forward, including explicit weights).
# ----------------------------------------------------------------------------
def make_tv3d_weights(dim: int):
    edge = jnp.array([0, dim - 2])
    wr = jnp.ones((3, dim, dim, dim - 1), jnp.float32).at[:, :, :, edge].multiply(2.0)
    wg = jnp.ones((3, dim, dim - 1, dim), jnp.float32).at[:, :, edge, :].multiply(2.0)
    wb = jnp.ones((3, dim - 1, dim, dim), jnp.float32).at[:, edge, :, :].multiply(2.0)
    return wr, wg, wb


def tv_3d_ref(lut, wr, wg, wb):
    dif_r = lut[:, :, :, :-1] - lut[:, :, :, 1:]
    dif_g = lut[:, :, :-1, :] - lut[:, :, 1:, :]
    dif_b = lut[:, :-1, :, :] - lut[:, 1:, :, :]
    tv = (jnp.mean(dif_r ** 2 * wr) + jnp.mean(dif_g ** 2 * wg)
          + jnp.mean(dif_b ** 2 * wb))
    mn = (jnp.mean(jax.nn.relu(dif_r)) + jnp.mean(jax.nn.relu(dif_g))
          + jnp.mean(jax.nn.relu(dif_b)))
    return tv, mn


if __name__ == "__main__":
    for dim in (9, 33):   # small dim + the module's default dim
        key = jax.random.PRNGKey(0)
        lut = jax.random.normal(key, (3, dim, dim, dim), dtype=jnp.float32)

        tv, mn = tv_3d(lut)
        tv = jax.block_until_ready(tv)
        mn = jax.block_until_ready(mn)

        tv_r, mn_r = tv_3d_ref(lut, *make_tv3d_weights(dim))
        assert jnp.allclose(tv, tv_r, rtol=1e-4, atol=1e-5), (dim, tv, tv_r)
        assert jnp.allclose(mn, mn_r, rtol=1e-4, atol=1e-5), (dim, mn, mn_r)

    print("KERNEL_OK")
</pallas_src>

<mosaic_0001>
module attributes {stable_mosaic.version = 11 : i64} {
  func.func @_tv3d_kernel(%arg0: memref<3x9x81xf32, #tpu.memory_space<vmem>>, %arg1: memref<2xf32, #tpu.memory_space<smem>>) attributes {dimension_semantics = [], scalar_prefetch = 0 : i64, scratch_operands = 0 : i64, tpu.core_type = #tpu.core_type<tc>} {
    %c0 = arith.constant 0 : index
    %c0_0 = arith.constant 0 : index
    %c0_1 = arith.constant 0 : index
    %0 = vector.load %arg0[%c0, %c0_0, %c0_1] : memref<3x9x81xf32, #tpu.memory_space<vmem>>, vector<3x9x81xf32>
    %1 = vector.extract_strided_slice %0 {offsets = [0, 0, 0], sizes = [3, 9, 80], strides = [1, 1, 1]} : vector<3x9x81xf32> to vector<3x9x80xf32>
    %2 = vector.extract_strided_slice %0 {offsets = [0, 0, 1], sizes = [3, 9, 80], strides = [1, 1, 1]} : vector<3x9x81xf32> to vector<3x9x80xf32>
    %3 = arith.subf %1, %2 : vector<3x9x80xf32>
    %4 = arith.mulf %3, %3 : vector<3x9x80xf32>
    %cst = arith.constant dense<0.000000e+00> : vector<9x80xf32>
    %5 = vector.multi_reduction <add>, %4, %cst [0] : vector<3x9x80xf32> to vector<9x80xf32>
    %cst_2 = arith.constant dense<0.000000e+00> : vector<80xf32>
    %6 = vector.multi_reduction <add>, %5, %cst_2 [0] : vector<9x80xf32> to vector<80xf32>
    %7 = vector.shape_cast %6 : vector<80xf32> to vector<1x80xf32>
    %cst_3 = arith.constant 0.000000e+00 : f32
    %8 = vector.broadcast %cst_3 : f32 to vector<3x9x80xf32>
    %9 = arith.maximumf %3, %8 : vector<3x9x80xf32>
    %cst_4 = arith.constant dense<0.000000e+00> : vector<9x80xf32>
    %10 = vector.multi_reduction <add>, %9, %cst_4 [0] : vector<3x9x80xf32> to vector<9x80xf32>
    %cst_5 = arith.constant dense<0.000000e+00> : vector<80xf32>
    %11 = vector.multi_reduction <add>, %10, %cst_5 [0] : vector<9x80xf32> to vector<80xf32>
    %12 = vector.shape_cast %11 : vector<80xf32> to vector<1x80xf32>
    %13 = tpu.iota {dimensions = array<i32: 1>} : vector<1x80xi32>
    %14 = arith.sitofp %13 : vector<1x80xi32> to vector<1x80xf32>
    %cst_6 = arith.constant 5.000000e-01 : f32
    %15 = vector.broadcast %cst_6 : f32 to vector<1x80xf32>
    %16 = arith.addf %14, %15 : vector<1x80xf32>
    %cst_7 = arith.constant 0.111111112 : f32
    %17 = vector.broadcast %cst_7 : f32 to vector<1x80xf32>
    %18 = arith.mulf %16, %17 : vector<1x80xf32>
    %19 = math.floor %18 : vector<1x80xf32>
    %cst_8 = arith.constant 9.000000e+00 : f32
    %20 = vector.broadcast %cst_8 : f32 to vector<1x80xf32>
    %21 = arith.mulf %19, %20 : vector<1x80xf32>
    %22 = arith.subf %14, %21 : vector<1x80xf32>
    %cst_9 = arith.constant 7.500000e+00 : f32
    %23 = vector.broadcast %cst_9 : f32 to vector<1x80xf32>
    %24 = arith.cmpf olt, %22, %23 : vector<1x80xf32>
    %25 = arith.extui %24 : vector<1x80xi1> to vector<1x80xi32>
    %26 = arith.sitofp %25 : vector<1x80xi32> to vector<1x80xf32>
    %cst_10 = arith.constant 5.000000e-01 : f32
    %27 = vector.broadcast %cst_10 : f32 to vector<1x80xf32>
    %28 = arith.cmpf olt, %22, %27 : vector<1x80xf32>
    %29 = arith.extui %28 : vector<1x80xi1> to vector<1x80xi32>
    %30 = arith.sitofp %29 : vector<1x80xi32> to vector<1x80xf32>
    %cst_11 = arith.constant 6.500000e+00 : f32
    %31 = vector.broadcast %cst_11 : f32 to vector<1x80xf32>
    %32 = arith.cmpf ogt, %22, %31 : vector<1x80xf32>
    %cst_12 = arith.constant 7.500000e+00 : f32
    %33 = vector.broadcast %cst_12 : f32 to vector<1x80xf32>
    %34 = arith.cmpf olt, %22, %33 : vector<1x80xf32>
    %35 = arith.andi %32, %34 : vector<1x80xi1>
    %36 = arith.extui %35 : vector<1x80xi1> to vector<1x80xi32>
    %37 = arith.sitofp %36 : vector<1x80xi32> to vector<1x80xf32>
    %38 = arith.addf %26, %30 : vector<1x80xf32>
    %39 = arith.addf %38, %37 : vector<1x80xf32>
    %40 = arith.mulf %7, %39 : vector<1x80xf32>
    %41 = vector.shape_cast %40 : vector<1x80xf32> to vector<1x1x80xf32>
    %cst_13 = arith.constant dense<0.000000e+00> : vector<1xf32>
    %42 = vector.multi_reduction <add>, %41, %cst_13 [1, 2] : vector<1x1x80xf32> to vector<1xf32>
    %43 = vector.shape_cast %42 : vector<1xf32> to vector<1x1x1xf32>
    %44 = vector.extract %43[0, 0, 0] : f32 from vector<1x1x1xf32>
    %45 = arith.mulf %12, %26 : vector<1x80xf32>
    %46 = vector.shape_cast %45 : vector<1x80xf32> to vector<1x1x80xf32>
    %cst_14 = arith.constant dense<0.000000e+00> : vector<1xf32>
    %47 = vector.multi_reduction <add>, %46, %cst_14 [1, 2] : vector<1x1x80xf32> to vector<1xf32>
    %48 = vector.shape_cast %47 : vector<1xf32> to vector<1x1x1xf32>
    %49 = vector.extract %48[0, 0, 0] : f32 from vector<1x1x1xf32>
    %50 = vector.extract_strided_slice %0 {offsets = [0, 0, 0], sizes = [3, 9, 72], strides = [1, 1, 1]} : vector<3x9x81xf32> to vector<3x9x72xf32>
    %51 = vector.extract_strided_slice %0 {offsets = [0, 0, 9], sizes = [3, 9, 72], strides = [1, 1, 1]} : vector<3x9x81xf32> to vector<3x9x72xf32>
    %52 = arith.subf %50, %51 : vector<3x9x72xf32>
    %53 = arith.mulf %52, %52 : vector<3x9x72xf32>
    %cst_15 = arith.constant dense<0.000000e+00> : vector<9x72xf32>
    %54 = vector.multi_reduction <add>, %53, %cst_15 [0] : vector<3x9x72xf32> to vector<9x72xf32>
    %cst_16 = arith.constant dense<0.000000e+00> : vector<72xf32>
    %55 = vector.multi_reduction <add>, %54, %cst_16 [0] : vector<9x72xf32> to vector<72xf32>
    %56 = vector.shape_cast %55 : vector<72xf32> to vector<1x72xf32>
    %cst_17 = arith.constant 0.000000e+00 : f32
    %57 = vector.broadcast %cst_17 : f32 to vector<3x9x72xf32>
    %58 = arith.maximumf %52, %57 : vector<3x9x72xf32>
    %cst_18 = arith.constant dense<0.000000e+00> : vector<9x72xf32>
    %59 = vector.multi_reduction <add>, %58, %cst_18 [0] : vector<3x9x72xf32> to vector<9x72xf32>
    %cst_19 = arith.constant dense<0.000000e+00> : vector<72xf32>
    %60 = vector.multi_reduction <add>, %59, %cst_19 [0] : vector<9x72xf32> to vector<72xf32>
    %61 = vector.shape_cast %60 : vector<72xf32> to vector<1x72xf32>
    %62 = tpu.iota {dimensions = array<i32: 1>} : vector<1x72xi32>
    %c9_i32 = arith.constant 9 : i32
    %63 = vector.broadcast %c9_i32 : i32 to vector<1x72xi32>
    %64 = arith.cmpi slt, %62, %63 : vector<1x72xi32>
    %65 = arith.extui %64 : vector<1x72xi1> to vector<1x72xi32>
    %66 = arith.sitofp %65 : vector<1x72xi32> to vector<1x72xf32>
    %cst_20 = arith.constant 1.000000e+00 : f32
    %67 = vector.broadcast %cst_20 : f32 to vector<1x72xf32>
    %68 = arith.addf %67, %66 : vector<1x72xf32>
    %c63_i32 = arith.constant 63 : i32
    %69 = vector.broadcast %c63_i32 : i32 to vector<1x72xi32>
    %70 = arith.cmpi sge, %62, %69 : vector<1x72xi32>
    %71 = arith.extui %70 : vector<1x72xi1> to vector<1x72xi32>
    %72 = arith.sitofp %71 : vector<1x72xi32> to vector<1x72xf32>
    %73 = arith.addf %68, %72 : vector<1x72xf32>
    %74 = arith.mulf %56, %73 : vector<1x72xf32>
    %75 = vector.shape_cast %74 : vector<1x72xf32> to vector<1x1x72xf32>
    %cst_21 = arith.constant dense<0.000000e+00> : vector<1xf32>
    %76 = vector.multi_reduction <add>, %75, %cst_21 [1, 2] : vector<1x1x72xf32> to vector<1xf32>
    %77 = vector.shape_cast %76 : vector<1xf32> to vector<1x1x1xf32>
    %78 = vector.extract %77[0, 0, 0] : f32 from vector<1x1x1xf32>
    %79 = arith.addf %44, %78 : f32
    %80 = vector.shape_cast %61 : vector<1x72xf32> to vector<1x1x72xf32>
    %cst_22 = arith.constant dense<0.000000e+00> : vector<1xf32>
    %81 = vector.multi_reduction <add>, %80, %cst_22 [1, 2] : vector<1x1x72xf32> to vector<1xf32>
    %82 = vector.shape_cast %81 : vector<1xf32> to vector<1x1x1xf32>
    %83 = vector.extract %82[0, 0, 0] : f32 from vector<1x1x1xf32>
    %84 = arith.addf %49, %83 : f32
    %85 = vector.extract_strided_slice %0 {offsets = [0, 0, 0], sizes = [3, 8, 81], strides = [1, 1, 1]} : vector<3x9x81xf32> to vector<3x8x81xf32>
    %86 = vector.extract_strided_slice %0 {offsets = [0, 1, 0], sizes = [3, 8, 81], strides = [1, 1, 1]} : vector<3x9x81xf32> to vector<3x8x81xf32>
    %87 = arith.subf %85, %86 : vector<3x8x81xf32>
    %88 = arith.mulf %87, %87 : vector<3x8x81xf32>
    %cst_23 = arith.constant dense<0.000000e+00> : vector<8x81xf32>
    %89 = vector.multi_reduction <add>, %88, %cst_23 [0] : vector<3x8x81xf32> to vector<8x81xf32>
    %cst_24 = arith.constant dense<0.000000e+00> : vector<81xf32>
    %90 = vector.multi_reduction <add>, %89, %cst_24 [0] : vector<8x81xf32> to vector<81xf32>
    %91 = vector.shape_cast %90 : vector<81xf32> to vector<1x81xf32>
    %cst_25 = arith.constant 0.000000e+00 : f32
    %92 = vector.broadcast %cst_25 : f32 to vector<3x8x81xf32>
    %93 = arith.maximumf %87, %92 : vector<3x8x81xf32>
    %cst_26 = arith.constant dense<0.000000e+00> : vector<8x81xf32>
    %94 = vector.multi_reduction <add>, %93, %cst_26 [0] : vector<3x8x81xf32> to vector<8x81xf32>
    %cst_27 = arith.constant dense<0.000000e+00> : vector<81xf32>
    %95 = vector.multi_reduction <add>, %94, %cst_27 [0] : vector<8x81xf32> to vector<81xf32>
    %96 = vector.shape_cast %95 : vector<81xf32> to vector<1x81xf32>
    %97 = vector.extract_strided_slice %0 {offsets = [0, 0, 0], sizes = [3, 1, 81], strides = [1, 1, 1]} : vector<3x9x81xf32> to vector<3x1x81xf32>
    %98 = vector.extract_strided_slice %0 {offsets = [0, 1, 0], sizes = [3, 1, 81], strides = [1, 1, 1]} : vector<3x9x81xf32> to vector<3x1x81xf32>
    %99 = arith.subf %97, %98 : vector<3x1x81xf32>
    %100 = vector.extract_strided_slice %0 {offsets = [0, 7, 0], sizes = [3, 1, 81], strides = [1, 1, 1]} : vector<3x9x81xf32> to vector<3x1x81xf32>
    %101 = vector.extract_strided_slice %0 {offsets = [0, 8, 0], sizes = [3, 1, 81], strides = [1, 1, 1]} : vector<3x9x81xf32> to vector<3x1x81xf32>
    %102 = arith.subf %100, %101 : vector<3x1x81xf32>
    %103 = arith.mulf %99, %99 : vector<3x1x81xf32>
    %cst_28 = arith.constant dense<0.000000e+00> : vector<1x81xf32>
    %104 = vector.multi_reduction <add>, %103, %cst_28 [0] : vector<3x1x81xf32> to vector<1x81xf32>
    %cst_29 = arith.constant dense<0.000000e+00> : vector<81xf32>
    %105 = vector.multi_reduction <add>, %104, %cst_29 [0] : vector<1x81xf32> to vector<81xf32>
    %106 = vector.shape_cast %105 : vector<81xf32> to vector<1x81xf32>
    %107 = arith.addf %91, %106 : vector<1x81xf32>
    %108 = arith.mulf %102, %102 : vector<3x1x81xf32>
    %cst_30 = arith.constant dense<0.000000e+00> : vector<1x81xf32>
    %109 = vector.multi_reduction <add>, %108, %cst_30 [0] : vector<3x1x81xf32> to vector<1x81xf32>
    %cst_31 = arith.constant dense<0.000000e+00> : vector<81xf32>
    %110 = vector.multi_reduction <add>, %109, %cst_31 [0] : vector<1x81xf32> to vector<81xf32>
    %111 = vector.shape_cast %110 : vector<81xf32> to vector<1x81xf32>
    %112 = arith.addf %107, %111 : vector<1x81xf32>
    %113 = vector.shape_cast %112 : vector<1x81xf32> to vector<1x1x81xf32>
    %cst_32 = arith.constant dense<0.000000e+00> : vector<1xf32>
    %114 = vector.multi_reduction <add>, %113, %cst_32 [1, 2] : vector<1x1x81xf32> to vector<1xf32>
    %115 = vector.shape_cast %114 : vector<1xf32> to vector<1x1x1xf32>
    %116 = vector.extract %115[0, 0, 0] : f32 from vector<1x1x1xf32>
    %117 = arith.addf %79, %116 : f32
    %118 = vector.shape_cast %96 : vector<1x81xf32> to vector<1x1x81xf32>
    %cst_33 = arith.constant dense<0.000000e+00> : vector<1xf32>
    %119 = vector.multi_reduction <add>, %118, %cst_33 [1, 2] : vector<1x1x81xf32> to vector<1xf32>
    %120 = vector.shape_cast %119 : vector<1xf32> to vector<1x1x1xf32>
    %121 = vector.extract %120[0, 0, 0] : f32 from vector<1x1x1xf32>
    %122 = arith.addf %84, %121 : f32
    %cst_34 = arith.constant 5.14403277E-4 : f32
    %123 = arith.mulf %117, %cst_34 : f32
    %c0_35 = arith.constant 0 : index
    %124 = memref.load %arg1[%c0_35] : memref<2xf32, #tpu.memory_space<smem>>
    memref.store %123, %arg1[%c0_35] : memref<2xf32, #tpu.memory_space<smem>>
    %cst_36 = arith.constant 5.14403277E-4 : f32
    %125 = arith.mulf %122, %cst_36 : f32
    %c1 = arith.constant 1 : index
    %126 = memref.load %arg1[%c1] : memref<2xf32, #tpu.memory_space<smem>>
    memref.store %125, %arg1[%c1] : memref<2xf32, #tpu.memory_space<smem>>
    return
  }
}

</mosaic_0001>

<llo_original>
// kernel: tpu_custom_call.1
$region0: #{tpu_custom_call.1}
  #allocation0 [shape = 'u32[]', space=smem, size = 0x4, offset = 0x4, fixed_abs, tag = 'smem constant byte address 0x4 - core index']
  #allocation1 [shape = 'u32[144,128]{1,0:T(1,128)}', space=vmem, size = 0x12000, scoped, tag = 'internal scratch']
  %s0 = inlined_call_operand.vmem [shape: f32[3,9,81], index: 0, kind: input, shape index: {}]
  %s1 = inlined_call_operand.hbm [shape: f32[2], index: 1, kind: output, shape index: {}]
  %s2 = sld [smem:[#allocation0]]
  $region14: #{tpu_custom_call.1} parent=0
    _
  %s4 = ssub.s32 1, %s2
  %s5 = scalar_select 0, %s4, %s2
  $region1: #{tpu_custom_call.1} parent=0
    #allocation2 [shape = 'u8[512]{0}', space=smem, size = 0x200, scoped, tag = 'output window, operand 0, single buffered']
    #allocation3 [shape = 's32[1]{0}', space=sflag, size = 0x4, scoped, tag = 'scoped memory for tpu_custom_call.1']
    %6 = vsyncpa [#allocation3], 0
    // Predicated region
    $region2: #{tpu_custom_call.1} parent=1 // pred_check
      _
    $region3: #{tpu_custom_call.1} parent=1 // pred_check_branch
      %8 = sbr.rel (0) target = $region5
    $region4: #{tpu_custom_call.1} parent=1 // pred_region
      _
    $region5: #{tpu_custom_call.1} parent=1 // pred_fallthru
      _
    %v9 = vld [vmem:[%s0] sm:$0xff]
    %v10 = vld [vmem:[%s0 + $0x8] sm:$0x1]
    %v11 = vld [vmem:[%s0 + $0x10] sm:$0xff]
    %v12 = vld [vmem:[%s0 + $0x18] sm:$0x1]
    %v13 = vld [vmem:[%s0 + $0x20] sm:$0xff]
    %v14 = vld [vmem:[%s0 + $0x28] sm:$0x1]
    %21 = vrot.lane.b32.xlu0 %v9, 127
    %v22 = vpop.permute.xlu0 %21
    %23 = vrot.lane.b32.xlu0 %v10, 127
    %v24 = vpop.permute.xlu0 %23
    %25 = vrot.lane.b32.xlu0 %v11, 127
    %v26 = vpop.permute.xlu0 %25
    %27 = vrot.lane.b32.xlu0 %v12, 127
    %v28 = vpop.permute.xlu0 %27
    %29 = vrot.lane.b32.xlu0 %v13, 127
    %v30 = vpop.permute.xlu0 %29
    %31 = vrot.lane.b32.xlu0 %v14, 127
    %v32 = vpop.permute.xlu0 %31
    %v39 = vsub.f32 %v9, %v22
    %v40 = vsub.f32 %v10, %v24
    %v41 = vsub.f32 %v11, %v26
    %v42 = vsub.f32 %v12, %v28
    %v43 = vsub.f32 %v13, %v30
    %v44 = vsub.f32 %v14, %v32
    %v45 = vmul.f32 %v39, %v39
    %v46 = vmul.f32 %v40, %v40
    %v47 = vmul.f32 %v41, %v41
    %v48 = vmul.f32 %v42, %v42
    %v49 = vmul.f32 %v43, %v43
    %v50 = vmul.f32 %v44, %v44
    %vm51 = vcmask 654336
    %v52 = vsel %vm51, %v45, 0.0
    %v53 = vsel %vm51, %v47, 0.0
    %v54 = vadd.f32 %v52, %v53
    %v55 = vsel %vm51, %v49, 0.0
    %v56 = vadd.f32 %v54, %v55
    %vm57 = vcmask 647168
    %v58 = vsel %vm57, %v46, 0.0
    %v59 = vsel %vm57, %v48, 0.0
    %v60 = vadd.f32 %v58, %v59
    %v61 = vsel %vm57, %v50, 0.0
    %v62 = vadd.f32 %v60, %v61
    %v63 = vsel %vm51, %v56, 0.0
    %v64 = vsel %vm57, %v62, 0.0
    %v65 = vadd.f32 %v63, %v64
    %v66 = vrot.slane %v65, 4
    %v67 = vadd.f32 %v65, %v66
    %v68 = vrot.slane %v67, 2
    %v69 = vadd.f32 %v67, %v68
    %v70 = vrot.slane %v69, 1
    %v71 = vadd.f32 %v69, %v70
    %v72 = vmax.f32 %v39, 0.0
    %v73 = vmax.f32 %v40, 0.0
    %v74 = vmax.f32 %v41, 0.0
    %v75 = vmax.f32 %v42, 0.0
    %v76 = vmax.f32 %v43, 0.0
    %v77 = vmax.f32 %v44, 0.0
    %v78 = vsel %vm51, %v72, 0.0
    %v79 = vsel %vm51, %v74, 0.0
    %v80 = vadd.f32 %v78, %v79
    %v81 = vsel %vm51, %v76, 0.0
    %v82 = vadd.f32 %v80, %v81
    %v83 = vsel %vm57, %v73, 0.0
    %v84 = vsel %vm57, %v75, 0.0
    %v85 = vadd.f32 %v83, %v84
    %v86 = vsel %vm57, %v77, 0.0
    %v87 = vadd.f32 %v85, %v86
    %v88 = vsel %vm51, %v82, 0.0
    %v89 = vsel %vm57, %v87, 0.0
    %v90 = vadd.f32 %v88, %v89
    %v91 = vrot.slane %v90, 4
    %v92 = vadd.f32 %v90, %v91
    %v93 = vrot.slane %v92, 2
    %v94 = vadd.f32 %v92, %v93
    %v95 = vrot.slane %v94, 1
    %v96 = vadd.f32 %v94, %v95
    %v97 = vlaneseq
    %v98 = vand.u32 %v97, 127
    %v99 = vcvt.s32.f32 %v98
    %v100 = vadd.f32 %v99, 0.5
    %v101 = vmul.f32 %v100, 0.11111111
    %v102 = vfloor.f32 %v101
    %v103 = vmul.f32 %v102, 9.0
    %v104 = vsub.f32 %v99, %v103
    %vm105 = vcmp.lt.f32.partialorder %v104, 7.5
    %v106 = vsel %vm105, 1, 0
    %v107 = vcvt.s32.f32 %v106
    %vm108 = vcmp.lt.f32.partialorder %v104, 0.5
    %v109 = vsel %vm108, 1, 0
    %v110 = vcvt.s32.f32 %v109
    %vm111 = vcmp.gt.f32.partialorder %v104, 6.5
    %vm112 = vmand %vm111, %vm105
    %v113 = vsel %vm112, 1, 0
    %v114 = vcvt.s32.f32 %v113
    %v115 = vadd.f32 %v107, %v110
    %v116 = vadd.f32 %v115, %v114
    %v117 = vmul.f32 %v71, %v116
    %v118 = vsel %vm57, %v117, 0.0
    %119 = vadd.xlane.f32.xlu0 %v118
    %v120 = vpop.xlane.xlu0 %119
    %v121 = vrot.slane %v120, 4
    %v122 = vadd.f32 %v120, %v121
    %v123 = vrot.slane %v122, 2
    %v124 = vadd.f32 %v122, %v123
    %v125 = vrot.slane %v124, 1
    %v126 = vadd.f32 %v124, %v125
    %s127 = vtos %v126
    %v128 = vmul.f32 %v96, %v107
    %v129 = vsel %vm57, %v128, 0.0
    %130 = vadd.xlane.f32.xlu0 %v129
    %v131 = vpop.xlane.xlu0 %130
    %v132 = vrot.slane %v131, 4
    %v133 = vadd.f32 %v131, %v132
    %v134 = vrot.slane %v133, 2
    %v135 = vadd.f32 %v133, %v134
    %v136 = vrot.slane %v135, 1
    %v137 = vadd.f32 %v135, %v136
    %s138 = vtos %v137
    %139 = vrot.lane.b32.xlu0 %v9, 119
    %v140 = vpop.permute.xlu0 %139
    %141 = vrot.lane.b32.xlu0 %v10, 119
    %v142 = vpop.permute.xlu0 %141
    %143 = vrot.lane.b32.xlu0 %v11, 119
    %v144 = vpop.permute.xlu0 %143
    %145 = vrot.lane.b32.xlu0 %v12, 119
    %v146 = vpop.permute.xlu0 %145
    %147 = vrot.lane.b32.xlu0 %v13, 119
    %v148 = vpop.permute.xlu0 %147
    %149 = vrot.lane.b32.xlu0 %v14, 119
    %v150 = vpop.permute.xlu0 %149
    %v157 = vsub.f32 %v9, %v140
    %v158 = vsub.f32 %v10, %v142
    %v159 = vsub.f32 %v11, %v144
    %v160 = vsub.f32 %v12, %v146
    %v161 = vsub.f32 %v13, %v148
    %v162 = vsub.f32 %v14, %v150
    %v163 = vmul.f32 %v157, %v157
    %v164 = vmul.f32 %v158, %v158
    %v165 = vmul.f32 %v159, %v159
    %v166 = vmul.f32 %v160, %v160
    %v167 = vmul.f32 %v161, %v161
    %v168 = vmul.f32 %v162, %v162
    %vm169 = vcmask 588800
    %v170 = vsel %vm169, %v163, 0.0
    %v171 = vsel %vm169, %v165, 0.0
    %v172 = vadd.f32 %v170, %v171
    %v173 = vsel %vm169, %v167, 0.0
    %v174 = vadd.f32 %v172, %v173
    %vm175 = vcmask 581632
    %v176 = vsel %vm175, %v164, 0.0
    %v177 = vsel %vm175, %v166, 0.0
    %v178 = vadd.f32 %v176, %v177
    %v179 = vsel %vm175, %v168, 0.0
    %v180 = vadd.f32 %v178, %v179
    %v181 = vsel %vm169, %v174, 0.0
    %v182 = vsel %vm175, %v180, 0.0
    %v183 = vadd.f32 %v181, %v182
    %v184 = vrot.slane %v183, 4
    %v185 = vadd.f32 %v183, %v184
    %v186 = vrot.slane %v185, 2
    %v187 = vadd.f32 %v185, %v186
    %v188 = vrot.slane %v187, 1
    %v189 = vadd.f32 %v187, %v188
    %v190 = vmax.f32 %v157, 0.0
    %v191 = vmax.f32 %v158, 0.0
    %v192 = vmax.f32 %v159, 0.0
    %v193 = vmax.f32 %v160, 0.0
    %v194 = vmax.f32 %v161, 0.0
    %v195 = vmax.f32 %v162, 0.0
    %v196 = vsel %vm169, %v190, 0.0
    %v197 = vsel %vm169, %v192, 0.0
    %v198 = vadd.f32 %v196, %v197
    %v199 = vsel %vm169, %v194, 0.0
    %v200 = vadd.f32 %v198, %v199
    %v201 = vsel %vm175, %v191, 0.0
    %v202 = vsel %vm175, %v193, 0.0
    %v203 = vadd.f32 %v201, %v202
    %v204 = vsel %vm175, %v195, 0.0
    %v205 = vadd.f32 %v203, %v204
    %v206 = vsel %vm169, %v200, 0.0
    %v207 = vsel %vm175, %v205, 0.0
    %v208 = vadd.f32 %v206, %v207
    %v209 = vrot.slane %v208, 4
    %v210 = vadd.f32 %v208, %v209
    %v211 = vrot.slane %v210, 2
    %v212 = vadd.f32 %v210, %v211
    %v213 = vrot.slane %v212, 1
    %v214 = vadd.f32 %v212, %v213
    %vm215 = vcmp.lt.s32.totalorder %v98, 9
    %v216 = vsel %vm215, 1, 0
    %v217 = vcvt.s32.f32 %v216
    %v218 = vadd.f32 %v217, 1.0
    %vm219 = vcmp.ge.s32.totalorder %v98, 63
    %v220 = vsel %vm219, 1, 0
    %v221 = vcvt.s32.f32 %v220
    %v222 = vadd.f32 %v218, %v221
    %v223 = vmul.f32 %v189, %v222
    %v224 = vsel %vm175, %v223, 0.0
    %225 = vadd.xlane.f32.xlu0 %v224
    %v226 = vpop.xlane.xlu0 %225
    %v227 = vrot.slane %v226, 4
    %v228 = vadd.f32 %v226, %v227
    %v229 = vrot.slane %v228, 2
    %v230 = vadd.f32 %v228, %v229
    %v231 = vrot.slane %v230, 1
    %v232 = vadd.f32 %v230, %v231
    %s233 = vtos %v232
    %s234 = sadd.f32 %s127, %s233
    %v235 = vsel %vm175, %v214, 0.0
    %236 = vadd.xlane.f32.xlu0 %v235
    %v237 = vpop.xlane.xlu0 %236
    %v238 = vrot.slane %v237, 4
    %v239 = vadd.f32 %v237, %v238
    %v240 = vrot.slane %v239, 2
    %v241 = vadd.f32 %v239, %v240
    %v242 = vrot.slane %v241, 1
    %v243 = vadd.f32 %v241, %v242
    %s244 = vtos %v243
    %s245 = sadd.f32 %s138, %s244
    %vm246 = vcmask 1046528
    %v247 = vrot.slane %v9, 1
    %v248 = vrot.slane %v10, 1
    %v249 = vsel %vm246, %v247, %v248
    %v250 = vrot.slane %v11, 1
    %v251 = vrot.slane %v12, 1
    %v252 = vsel %vm246, %v250, %v251
    %v253 = vrot.slane %v13, 1
    %v254 = vrot.slane %v14, 1
    %v255 = vsel %vm246, %v253, %v254
    %v259 = vsub.f32 %v9, %v249
    %v260 = vsub.f32 %v11, %v252
    %v261 = vsub.f32 %v13, %v255
    %v262 = vmul.f32 %v259, %v259
    %v263 = vmul.f32 %v260, %v260
    %v264 = vmul.f32 %v261, %v261
    %vm265 = vcmask 662528
    %v266 = vsel %vm265, %v262, 0.0
    %v267 = vsel %vm265, %v263, 0.0
    %v268 = vadd.f32 %v266, %v267
    %v269 = vsel %vm265, %v264, 0.0
    %v270 = vadd.f32 %v268, %v269
    %v271 = vsel %vm265, %v270, 0.0
    %v272 = vrot.slane %v271, 4
    %v273 = vadd.f32 %v271, %v272
    %v274 = vrot.slane %v273, 2
    %v275 = vadd.f32 %v273, %v274
    %v276 = vrot.slane %v275, 1
    %v277 = vadd.f32 %v275, %v276
    %v278 = vmax.f32 %v259, 0.0
    %v279 = vmax.f32 %v260, 0.0
    %v280 = vmax.f32 %v261, 0.0
    %v281 = vsel %vm265, %v278, 0.0
    %v282 = vsel %vm265, %v279, 0.0
    %v283 = vadd.f32 %v281, %v282
    %v284 = vsel %vm265, %v280, 0.0
    %v285 = vadd.f32 %v283, %v284
    %v286 = vsel %vm265, %v285, 0.0
    %v287 = vrot.slane %v286, 4
    %v288 = vadd.f32 %v286, %v287
    %v289 = vrot.slane %v288, 2
    %v290 = vadd.f32 %v288, %v289
    %v291 = vrot.slane %v290, 1
    %v292 = vadd.f32 %v290, %v291
    %v296 = vsub.f32 %v9, %v247
    %v297 = vsub.f32 %v11, %v250
    %v298 = vsub.f32 %v13, %v253
    %v302 = vsub.f32 %v9, %v248
    %v303 = vsub.f32 %v11, %v251
    %v304 = vsub.f32 %v13, %v254
    %v305 = vmul.f32 %v296, %v296
    %v306 = vmul.f32 %v297, %v297
    %v307 = vmul.f32 %v298, %v298
    %vm308 = vcmask 655360
    %v309 = vsel %vm308, %v305, 0.0
    %v310 = vsel %vm308, %v306, 0.0
    %v311 = vadd.f32 %v309, %v310
    %v312 = vsel %vm308, %v307, 0.0
    %v313 = vadd.f32 %v311, %v312
    %v314 = vadd.f32 %v313, 0.0
    %v315 = vadd.f32 %v277, %v314
    %v316 = vmul.f32 %v302, %v302
    %v317 = vmul.f32 %v303, %v303
    %v318 = vmul.f32 %v304, %v304
    %vm319 = vcmask 662535
    %v320 = vsel %vm319, %v316, 0.0
    %v321 = vsel %vm319, %v317, 0.0
    %v322 = vadd.f32 %v320, %v321
    %v323 = vsel %vm319, %v318, 0.0
    %v324 = vadd.f32 %v322, %v323
    %v325 = vadd.f32 %v324, 0.0
    %v327 = vrot.slane %v325, 7
    %v329 = vadd.f32 %v315, %v327
    %v330 = vsel %vm308, %v329, 0.0
    %331 = vadd.xlane.f32.xlu0 %v330
    %v332 = vpop.xlane.xlu0 %331
    %v333 = vrot.slane %v332, 4
    %v334 = vadd.f32 %v332, %v333
    %v335 = vrot.slane %v334, 2
    %v336 = vadd.f32 %v334, %v335
    %v337 = vrot.slane %v336, 1
    %v338 = vadd.f32 %v336, %v337
    %s339 = vtos %v338
    %s340 = sadd.f32 %s234, %s339
    %v341 = vsel %vm308, %v292, 0.0
    %342 = vadd.xlane.f32.xlu0 %v341
    %v343 = vpop.xlane.xlu0 %342
    %v344 = vrot.slane %v343, 4
    %v345 = vadd.f32 %v343, %v344
    %v346 = vrot.slane %v345, 2
    %v347 = vadd.f32 %v345, %v346
    %v348 = vrot.slane %v347, 1
    %v349 = vadd.f32 %v347, %v348
    %s350 = vtos %v349
    %s351 = sadd.f32 %s245, %s350
    %s352 = smul.f32 %s340, 0.0005144033
    %s353 = scalar_lea.smem [#allocation2], 0
    %354 = sst [smem:[%s353]] %s352
    %s355 = smul.f32 %s351, 0.0005144033
    %s356 = scalar_lea.smem [#allocation2], 1
    %357 = sst [smem:[%s356]] %s355
    // Predicated region
    $region6: #{tpu_custom_call.1} parent=1 // pred_check
      _
    $region7: #{tpu_custom_call.1} parent=1 // pred_check_branch
      %359 = sbr.rel (0) target = $region9
    $region8: #{tpu_custom_call.1} parent=1 // pred_region
      %s361 = ssub.s32 16, 16
      %362 = vsyncadd [#allocation3], %s361
      %365 = dma.smem_to_hbm [#allocation2], 16, %s1, [#allocation3]
    $region9: #{tpu_custom_call.1} parent=1 // pred_fallthru
      _
    // Predicated region
    $region10: #{tpu_custom_call.1} parent=1 // pred_check
      _
    $region11: #{tpu_custom_call.1} parent=1 // pred_check_branch
      %367 = sbr.rel (0) target = $region13
    $region12: #{tpu_custom_call.1} parent=1 // pred_region
      %368 = dma.done [#allocation3], 16
    $region13: #{tpu_custom_call.1} parent=1 // pred_fallthru
      _
    %369 = sfence
    %370 = vsyncpa [#allocation3], 1

</llo_original>
